<compile_context>
chip_gen: v6e
topology: v6e:2x2x1
jax: 0.10.0
libtpu: 0.0.40
codegen_flags: <defaults>
</compile_context>

<pallas_src>
import math
from functools import partial

import jax
import jax.numpy as jnp
from jax import lax
from jax.experimental import pallas as pl
from jax.experimental.pallas import tpu as pltpu


# ---------------------------------------------------------------------------
# Workspace bookkeeping (mirrors get_allreduce_mnnvl_workspace size math).
# ---------------------------------------------------------------------------
def mnnvl_max_num_elements(dtype) -> int:
    itemsize = jnp.dtype(dtype).itemsize
    stride = 3 * 2 * itemsize
    lcm_hidden_dim = 286720
    buffer_size_in_bytes = math.ceil(12_000_000 / (lcm_hidden_dim * stride)) * (
        lcm_hidden_dim * stride
    )
    return buffer_size_in_bytes // stride


# ---------------------------------------------------------------------------
# Small integer helpers
# ---------------------------------------------------------------------------
def _cdiv(a: int, b: int) -> int:
    return -(-a // b)


def _round_up(x: int, m: int) -> int:
    return _cdiv(x, m) * m


def _sublane_multiple(dtype) -> int:
    # Rows per packed sublane tile: 8 for f32, 16 for bf16/fp16.
    return max(8, 32 // max(jnp.dtype(dtype).itemsize, 1))


# ---------------------------------------------------------------------------
# VMEM budgeting / tile selection.
# ---------------------------------------------------------------------------
def _vmem_plan():
    """Return (working-set budget, scoped-vmem limit) in bytes for this chip."""
    phys = 64 * 1024 * 1024
    try:
        info = pltpu.get_tpu_info()
        q = int(getattr(info, "vmem_capacity_bytes", 0) or 0)
        if q > 0:
            phys = q
    except Exception:
        pass
    # Clamp to 64 MiB: per-TensorCore minimum across v5e/v6e/v7x and safe even
    # if get_tpu_info reports per-chip capacity on 2-TC parts (v7x).
    phys = min(max(phys, 32 * 1024 * 1024), 64 * 1024 * 1024)
    limit = max(24 * 1024 * 1024, phys - 16 * 1024 * 1024)   # scoped-VMEM cap
    budget = max(16 * 1024 * 1024, limit - 6 * 1024 * 1024)  # working-set target
    return budget, limit


def _choose_tile_h(H, per_elem_bytes, budget_bytes):
    if H % 128 != 0:
        return H  # full-extent lane dim is always legal
    cols = budget_bytes // max(1, 8 * per_elem_bytes)
    cols = max(128, (cols // 128) * 128)
    return H if cols >= H else cols


def _choose_tile_t(T, tile_H, dtype, per_elem_bytes, budget_bytes, split_cores=True):
    sub = _sublane_multiple(dtype)
    rows = budget_bytes // max(1, tile_H * per_elem_bytes)
    rows = max(sub, (rows // sub) * sub)
    rows = min(rows, 4096)
    if split_cores and T >= 2 * sub:
        # Ensure >= 2 token-axis grid steps so both v7x TensorCores get work.
        rows = min(rows, max(sub, _round_up(_cdiv(T, 2), sub)))
    return T if rows >= T else rows


def _lane_dense_view(T, H):
    """Return (rows, L) for a lane-dense 2D view of T*H elems, or None."""
    total = T * H
    for L in (2048, 1024, 512, 256, 128):
        if total % L == 0 and total // L >= 1:
            return total // L, L
    return None


# ---------------------------------------------------------------------------
# Pallas kernels
# ---------------------------------------------------------------------------
def _ar_fold_kernel(x_ref, o_ref):
    # x_ref: (tp, tile_T, tile_H); one-shot sum over the folded tp axis.
    o_ref[...] = jnp.sum(x_ref[...].astype(jnp.float32), axis=0).astype(o_ref.dtype)


def _ar_acc_kernel(x_ref, o_ref, acc_ref):
    # grid = (t, h, tp); tp is the last ("arbitrary") reduction axis.
    k = pl.program_id(2)

    @pl.when(k == 0)
    def _():
        acc_ref[...] = x_ref[...].astype(jnp.float32)

    @pl.when(k != 0)
    def _():
        acc_ref[...] += x_ref[...].astype(jnp.float32)

    @pl.when(k == pl.num_programs(2) - 1)
    def _():
        o_ref[...] = acc_ref[...].astype(o_ref.dtype)


def _ar_acc_f32_kernel(x_ref, o_ref):
    # f32 I/O: accumulate directly into the resident output block (no scratch).
    k = pl.program_id(2)

    @pl.when(k == 0)
    def _():
        o_ref[...] = x_ref[...]

    @pl.when(k != 0)
    def _():
        o_ref[...] += x_ref[...]


def _ar_rms_fold_kernel(x_ref, res_ref, w_ref, o_ref, res_out_ref, *, eps):
    # x_ref: (tp, tile_T, H); single-step fused allreduce + residual + rmsnorm.
    r = jnp.sum(x_ref[...].astype(jnp.float32), axis=0) + res_ref[...].astype(jnp.float32)
    res_out_ref[...] = r.astype(res_out_ref.dtype)
    var = jnp.mean(r * r, axis=-1, keepdims=True)
    inv = lax.rsqrt(var + eps)
    o_ref[...] = (r * inv * w_ref[...].astype(jnp.float32)).astype(o_ref.dtype)


def _ar_rms_acc_kernel(x_ref, res_ref, w_ref, o_ref, res_out_ref, acc_ref, *, eps):
    # grid = (t, tp); tp is the last ("arbitrary") reduction axis.
    k = pl.program_id(1)

    @pl.when(k == 0)
    def _():
        acc_ref[...] = x_ref[...].astype(jnp.float32)

    @pl.when(k != 0)
    def _():
        acc_ref[...] += x_ref[...].astype(jnp.float32)

    @pl.when(k == pl.num_programs(1) - 1)
    def _():
        # Fold the residual add into acc_ref IN PLACE so no extra (tile_T, H)
        # f32 temp is materialized (keeps the working set inside the budget).
        acc_ref[...] += res_ref[...].astype(jnp.float32)
        r = acc_ref[...]
        res_out_ref[...] = r.astype(res_out_ref.dtype)
        var = jnp.mean(r * r, axis=-1, keepdims=True)  # row-wise RMS over H
        inv = lax.rsqrt(var + eps)
        o_ref[...] = (r * inv * w_ref[...].astype(jnp.float32)).astype(o_ref.dtype)


# ---------------------------------------------------------------------------
# Wrappers (grid / BlockSpec plumbing)
# ---------------------------------------------------------------------------
def mnnvl_allreduce(per_rank_input, allow_fold=True):
    """Fusion NONE path. per_rank_input: [tp, T, H] -> [T, H] sum over tp."""
    tp, T, H = per_rank_input.shape
    dtype = per_rank_input.dtype
    itemsize = jnp.dtype(dtype).itemsize
    x = per_rank_input

    # Lane-dense flatten for odd/small hidden sizes (elementwise, shape-agnostic).
    orig_TH = None
    if (H % 128 != 0) or (H < 512):
        view = _lane_dense_view(T, H)
        if view is not None and view != (T, H):
            orig_TH = (T, H)
            T, H = view
            x = x.reshape(tp, T, H)

    budget, vmem_limit = _vmem_plan()
    is_f32 = jnp.dtype(dtype) == jnp.dtype(jnp.float32)
    sub = _sublane_multiple(dtype)

    cost = pl.CostEstimate(
        flops=int(tp * T * H),
        transcendentals=0,
        bytes_accessed=int((tp + 1) * T * H * itemsize),
    )

    # --- fold path: whole (tp, T, H) input + output fits the VMEM budget ---
    fold_bytes = (2 * tp + 2) * T * H * itemsize  # double-buffered input + output
    if allow_fold and fold_bytes <= budget:
        tile_T = T
        if T >= 2 * sub:
            tile_T = min(T, _round_up(_cdiv(T, 2), sub))  # both v7x TCs get work
        grid = (pl.cdiv(T, tile_T),)
        out = pl.pallas_call(
            _ar_fold_kernel,
            out_shape=jax.ShapeDtypeStruct((T, H), dtype),
            grid_spec=pltpu.PrefetchScalarGridSpec(
                num_scalar_prefetch=0,
                grid=grid,
                in_specs=[pl.BlockSpec((tp, tile_T, H), lambda i: (0, i, 0))],
                out_specs=pl.BlockSpec((tile_T, H), lambda i: (i, 0)),
            ),
            compiler_params=pltpu.CompilerParams(
                dimension_semantics=("parallel",),
                vmem_limit_bytes=vmem_limit,
            ),
            cost_estimate=cost,
        )(x)
    else:
        # --- accumulate path: tp as the last "arbitrary" axis ---
        # per-element VMEM: 2x dbuf input + 2x dbuf output (+ f32 acc if not f32 I/O)
        per_elem = 4 * itemsize + (0 if is_f32 else 4)
        tile_H = _choose_tile_h(H, per_elem, budget)
        tile_T = _choose_tile_t(T, tile_H, dtype, per_elem, budget)
        grid_T = pl.cdiv(T, tile_T)
        if grid_T == 1 and H % 128 == 0 and tile_H > 128:
            # Token axis cannot be split; split hidden so both v7x TCs get work.
            tile_H = min(tile_H, max(128, _round_up(_cdiv(H, 2), 128)))
        grid = (grid_T, pl.cdiv(H, tile_H), tp)

        if is_f32:
            kernel = _ar_acc_f32_kernel
            scratch = []
        else:
            kernel = _ar_acc_kernel
            scratch = [pltpu.VMEM((tile_T, tile_H), jnp.float32)]

        out = pl.pallas_call(
            kernel,
            out_shape=jax.ShapeDtypeStruct((T, H), dtype),
            grid_spec=pltpu.PrefetchScalarGridSpec(
                num_scalar_prefetch=0,
                grid=grid,
                in_specs=[
                    pl.BlockSpec((None, tile_T, tile_H), lambda i, h, k: (k, i, h)),
                ],
                out_specs=pl.BlockSpec((tile_T, tile_H), lambda i, h, k: (i, h)),
                scratch_shapes=scratch,
            ),
            compiler_params=pltpu.CompilerParams(
                dimension_semantics=("parallel", "parallel", "arbitrary"),
                vmem_limit_bytes=vmem_limit,
            ),
            cost_estimate=cost,
        )(x)

    if orig_TH is not None:
        out = out.reshape(orig_TH)
    return out


def mnnvl_allreduce_residual_rmsnorm(per_rank_input, residual, norm_weight, eps,
                                     allow_fold=True):
    """Fusion RESIDUAL_RMS_NORM path.

    per_rank_input: [tp, T, H], residual: [T, H], norm_weight: [H]
    returns (normed_output [T, H], residual_out [T, H])
    """
    tp, T, H = per_rank_input.shape
    dtype = per_rank_input.dtype
    itemsize = jnp.dtype(dtype).itemsize
    budget, vmem_limit = _vmem_plan()
    sub = _sublane_multiple(dtype)

    w2d = norm_weight.reshape(1, H)
    eps = float(eps)

    cost = pl.CostEstimate(
        flops=int((tp + 4) * T * H),
        transcendentals=int(T),
        bytes_accessed=int((tp + 3) * T * H * itemsize + H * jnp.dtype(norm_weight.dtype).itemsize),
    )

    out_shapes = (
        jax.ShapeDtypeStruct((T, H), dtype),
        jax.ShapeDtypeStruct((T, H), dtype),
    )

    # --- fold path: whole problem fits the budget (decode-sized shapes) ---
    fold_bytes = T * H * (itemsize * (2 * tp + 6) + 4)  # dbuf in/res/outs + f32 temp
    if allow_fold and fold_bytes <= budget:
        tile_T = T
        if T >= 2 * sub:
            tile_T = min(T, _round_up(_cdiv(T, 2), sub))
        grid = (pl.cdiv(T, tile_T),)
        return pl.pallas_call(
            partial(_ar_rms_fold_kernel, eps=eps),
            out_shape=out_shapes,
            grid_spec=pltpu.PrefetchScalarGridSpec(
                num_scalar_prefetch=0,
                grid=grid,
                in_specs=[
                    pl.BlockSpec((tp, tile_T, H), lambda i: (0, i, 0)),
                    pl.BlockSpec((tile_T, H), lambda i: (i, 0)),
                    pl.BlockSpec((1, H), lambda i: (0, 0)),
                ],
                out_specs=[
                    pl.BlockSpec((tile_T, H), lambda i: (i, 0)),
                    pl.BlockSpec((tile_T, H), lambda i: (i, 0)),
                ],
            ),
            compiler_params=pltpu.CompilerParams(
                dimension_semantics=("parallel",),
                vmem_limit_bytes=vmem_limit,
            ),
            cost_estimate=cost,
        )(per_rank_input, residual, w2d)

    # --- accumulate path: tp as the last "arbitrary" axis, full H per tile ---
    # per-element VMEM: 2x dbuf x + 2x dbuf residual + 2x dbuf (out, res_out)
    #                   + f32 acc + epilogue headroom
    per_elem = 8 * itemsize + 8
    tile_T = _choose_tile_t(T, H, dtype, per_elem, budget)
    grid = (pl.cdiv(T, tile_T), tp)
    # TODO(synk): for extremely large H where even `sub` rows exceed the VMEM
    # budget, a two-pass (sum-of-squares then scale) split over H would be
    # needed; not required for realistic hidden sizes.

    return pl.pallas_call(
        partial(_ar_rms_acc_kernel, eps=eps),
        out_shape=out_shapes,
        grid_spec=pltpu.PrefetchScalarGridSpec(
            num_scalar_prefetch=0,
            grid=grid,
            in_specs=[
                pl.BlockSpec((None, tile_T, H), lambda i, k: (k, i, 0)),
                pl.BlockSpec((tile_T, H), lambda i, k: (i, 0)),
                pl.BlockSpec((1, H), lambda i, k: (0, 0)),
            ],
            out_specs=[
                pl.BlockSpec((tile_T, H), lambda i, k: (i, 0)),
                pl.BlockSpec((tile_T, H), lambda i, k: (i, 0)),
            ],
            scratch_shapes=[pltpu.VMEM((tile_T, H), jnp.float32)],
        ),
        compiler_params=pltpu.CompilerParams(
            dimension_semantics=("parallel", "arbitrary"),
            vmem_limit_bytes=vmem_limit,
        ),
        cost_estimate=cost,
    )(per_rank_input, residual, w2d)


# ---------------------------------------------------------------------------
# Module-like wrapper mimicking MNNVLAllReduce.forward
# ---------------------------------------------------------------------------
class MNNVLAllReducePallas:
    def __init__(self, tp_size: int, dtype=jnp.bfloat16):
        assert jnp.dtype(dtype) in (
            jnp.dtype(jnp.float16),
            jnp.dtype(jnp.bfloat16),
            jnp.dtype(jnp.float32),
        )
        self.tp_size = tp_size
        self.dtype = dtype
        self.max_num_elements_mnnvl = mnnvl_max_num_elements(dtype)
        # TODO(synk): the real multi-node multicast buffers / buffer_flags and
        # the lamport-style two-shot synchronization would be implemented with
        # pltpu.make_async_remote_copy ring/blast steps interleaved with the
        # local reduce; single-device Pallas reproduces only the reduction math.

    def forward(self, per_rank_input, fusion_op="NONE", residual=None,
                norm_weight=None, eps=1e-5, allow_fold=True):
        # per_rank_input: [tp_size, *shape] — per-rank copies of `input`
        shape = per_rank_input.shape[1:]
        numel = 1
        for s in shape:
            numel *= s
        if numel > self.max_num_elements_mnnvl:
            return None
        hidden = shape[-1]
        if self.max_num_elements_mnnvl % hidden != 0:
            return None
        x2d = per_rank_input.reshape(self.tp_size, -1, hidden)

        if fusion_op == "NONE":
            out = mnnvl_allreduce(x2d, allow_fold=allow_fold)
            return out.reshape(shape)
        elif fusion_op == "RESIDUAL_RMS_NORM":
            res2d = residual.reshape(-1, hidden)
            out, res_out = mnnvl_allreduce_residual_rmsnorm(
                x2d, res2d, norm_weight, eps, allow_fold=allow_fold)
            return out.reshape(shape), res_out.reshape(shape)
        return None


# ---------------------------------------------------------------------------
# Demo / self-check
# ---------------------------------------------------------------------------
if __name__ == "__main__":
    key = jax.random.PRNGKey(0)
    tp_size = 4
    num_tokens = 48
    hidden = 256
    dtype = jnp.bfloat16
    eps = 1e-5

    k1, k2, k3, k4 = jax.random.split(key, 4)
    per_rank = jax.random.normal(k1, (tp_size, num_tokens, hidden), jnp.float32).astype(dtype)
    residual = jax.random.normal(k2, (num_tokens, hidden), jnp.float32).astype(dtype)
    norm_weight = (1.0 + 0.01 * jnp.arange(hidden, dtype=jnp.float32)).astype(dtype)

    ar = MNNVLAllReducePallas(tp_size, dtype)
    ar_f32 = MNNVLAllReducePallas(tp_size, jnp.float32)

    # References (plain JAX, f32)
    ref_sum = jnp.sum(per_rank.astype(jnp.float32), axis=0)
    ref_res = ref_sum + residual.astype(jnp.float32)
    ref_norm = ref_res * lax.rsqrt(jnp.mean(ref_res * ref_res, axis=-1, keepdims=True) + eps)
    ref_norm = ref_norm * norm_weight.astype(jnp.float32)

    # 1) Fusion NONE — small shape exercises the fold path (+ lane-dense flatten)
    out_none = jax.block_until_ready(ar.forward(per_rank, fusion_op="NONE"))
    assert jnp.allclose(out_none.astype(jnp.float32),
                        ref_sum.astype(dtype).astype(jnp.float32),
                        atol=1e-2, rtol=1e-2)

    # 2) Fusion NONE — accumulate path (fold disabled) with bf16 scratch
    out_acc = jax.block_until_ready(ar.forward(per_rank, fusion_op="NONE", allow_fold=False))
    assert jnp.allclose(out_acc.astype(jnp.float32),
                        ref_sum.astype(dtype).astype(jnp.float32),
                        atol=1e-2, rtol=1e-2)

    # 3) Fusion NONE — f32 I/O, accumulate-into-output kernel (no scratch)
    per_rank_f32 = per_rank.astype(jnp.float32)
    out_f32 = jax.block_until_ready(
        ar_f32.forward(per_rank_f32, fusion_op="NONE", allow_fold=False))
    assert jnp.allclose(out_f32, ref_sum, atol=1e-4, rtol=1e-4)

    # 4) Fusion RESIDUAL_RMS_NORM — fold path
    out_norm, res_out = ar.forward(
        per_rank, fusion_op="RESIDUAL_RMS_NORM",
        residual=residual, norm_weight=norm_weight, eps=eps)
    out_norm = jax.block_until_ready(out_norm)
    res_out = jax.block_until_ready(res_out)
    assert jnp.allclose(res_out.astype(jnp.float32),
                        ref_res.astype(dtype).astype(jnp.float32),
                        atol=1e-2, rtol=1e-2)
    assert jnp.allclose(out_norm.astype(jnp.float32),
                        ref_norm.astype(dtype).astype(jnp.float32),
                        atol=5e-2, rtol=5e-2)

    # 5) Fusion RESIDUAL_RMS_NORM — accumulate path (fold disabled)
    out_norm2, res_out2 = ar.forward(
        per_rank, fusion_op="RESIDUAL_RMS_NORM",
        residual=residual, norm_weight=norm_weight, eps=eps, allow_fold=False)
    out_norm2 = jax.block_until_ready(out_norm2)
    res_out2 = jax.block_until_ready(res_out2)
    assert jnp.allclose(res_out2.astype(jnp.float32),
                        ref_res.astype(dtype).astype(jnp.float32),
                        atol=1e-2, rtol=1e-2)
    assert jnp.allclose(out_norm2.astype(jnp.float32),
                        ref_norm.astype(dtype).astype(jnp.float32),
                        atol=5e-2, rtol=5e-2)

    # 6) Fusion NONE with a ragged (non power-of-two) token count
    per_rank_ragged = jax.random.normal(k4, (tp_size, 40, hidden), jnp.float32).astype(dtype)
    out_ragged = jax.block_until_ready(ar.forward(per_rank_ragged, fusion_op="NONE"))
    ref_ragged = jnp.sum(per_rank_ragged.astype(jnp.float32), axis=0)
    assert jnp.allclose(out_ragged.astype(jnp.float32),
                        ref_ragged.astype(dtype).astype(jnp.float32),
                        atol=1e-2, rtol=1e-2)

    print("KERNEL_OK")
</pallas_src>

<mosaic_0001>
module attributes {stable_mosaic.version = 11 : i64} {
  func.func @_ar_fold_kernel(%arg0: i32, %arg1: memref<4x6x2048xbf16, #tpu.memory_space<vmem>>, %arg2: memref<6x2048xbf16, #tpu.memory_space<vmem>>) attributes {dimension_semantics = [#tpu.dimension_semantics<parallel>], iteration_bounds = array<i64: 1>, scalar_prefetch = 0 : i64, scratch_operands = 0 : i64, tpu.core_type = #tpu.core_type<tc>, window_params = [{transform_indices = @transform_0, window_bounds = array<i64: 4, 6, 2048>}, {transform_indices = @transform_1, window_bounds = array<i64: 6, 2048>}]} {
    %c0 = arith.constant 0 : index
    %c0_0 = arith.constant 0 : index
    %c0_1 = arith.constant 0 : index
    %0 = vector.load %arg1[%c0, %c0_0, %c0_1] : memref<4x6x2048xbf16, #tpu.memory_space<vmem>>, vector<4x6x2048xbf16>
    %1 = arith.extf %0 : vector<4x6x2048xbf16> to vector<4x6x2048xf32>
    %cst = arith.constant dense<0.000000e+00> : vector<6x2048xf32>
    %2 = vector.multi_reduction <add>, %1, %cst [0] : vector<4x6x2048xf32> to vector<6x2048xf32>
    %3 = arith.truncf %2 : vector<6x2048xf32> to vector<6x2048xbf16>
    %c0_2 = arith.constant 0 : index
    %c0_3 = arith.constant 0 : index
    %4 = vector.load %arg2[%c0_2, %c0_3] : memref<6x2048xbf16, #tpu.memory_space<vmem>>, vector<6x2048xbf16>
    tpu.vector_store %arg2[%c0_2, %c0_3], %3 {strides = array<i32>} : memref<6x2048xbf16, #tpu.memory_space<vmem>>, vector<6x2048xbf16>,
    return
  }
  func.func @transform_0(%arg0: i32) -> (i32, i32, i32) {
    %c0_i32 = arith.constant 0 : i32
    %c0_i32_0 = arith.constant 0 : i32
    %c0_i32_1 = arith.constant 0 : i32
    return %c0_i32, %arg0, %c0_i32_0 : i32, i32, i32
  }
  func.func @transform_1(%arg0: i32) -> (i32, i32) {
    %c0_i32 = arith.constant 0 : i32
    %c0_i32_0 = arith.constant 0 : i32
    return %arg0, %c0_i32 : i32, i32
  }
}

</mosaic_0001>

<llo_original>
// kernel: tpu_custom_call.1
$region0: #{tpu_custom_call.1}
  #allocation0 [shape = 'u32[]', space=smem, size = 0x4, offset = 0x4, fixed_abs, tag = 'smem constant byte address 0x4 - core index']
  #allocation1 [shape = 'u32[144,128]{1,0:T(1,128)}', space=vmem, size = 0x12000, scoped, tag = 'internal scratch']
  %s0 = inlined_call_operand.vmem [shape: bf16[4,6,2048], index: 0, kind: input, shape index: {}]
  %s1 = inlined_call_operand.hbm [shape: bf16[6,2048], index: 1, kind: output, shape index: {}]
  %s2 = sld [smem:[#allocation0]]
  $region14: #{tpu_custom_call.1} parent=0
    _
  %s4 = ssub.s32 1, %s2
  %s5 = scalar_select 0, %s4, %s2
  $region1: #{tpu_custom_call.1} parent=0
    #allocation2 [shape = 'u8[32768]{0}', space=vmem, size = 0x8000, scoped, tag = 'output window, operand 0, single buffered']
    #allocation3 [shape = 's32[1]{0}', space=sflag, size = 0x4, scoped, tag = 'scoped memory for tpu_custom_call.1']
    %6 = vsyncpa [#allocation3], 0
    // Predicated region
    $region2: #{tpu_custom_call.1} parent=1 // pred_check
      _
    $region3: #{tpu_custom_call.1} parent=1 // pred_check_branch
      %8 = sbr.rel (0) target = $region5
    $region4: #{tpu_custom_call.1} parent=1 // pred_region
      _
    $region5: #{tpu_custom_call.1} parent=1 // pred_fallthru
      _
    %v9 = vld [vmem:[%s0] sm:$0x77]
    %v10 = vld [vmem:[%s0 + $0x8] sm:$0x77]
    %v11 = vld [vmem:[%s0 + $0x10] sm:$0x77]
    %v12 = vld [vmem:[%s0 + $0x18] sm:$0x77]
    %v13 = vld [vmem:[%s0 + $0x20] sm:$0x77]
    %v14 = vld [vmem:[%s0 + $0x28] sm:$0x77]
    %v15 = vld [vmem:[%s0 + $0x30] sm:$0x77]
    %v16 = vld [vmem:[%s0 + $0x38] sm:$0x77]
    %v17 = vld [vmem:[%s0 + $0x40] sm:$0x77]
    %v18 = vld [vmem:[%s0 + $0x48] sm:$0x77]
    %v19 = vld [vmem:[%s0 + $0x50] sm:$0x77]
    %v20 = vld [vmem:[%s0 + $0x58] sm:$0x77]
    %v21 = vld [vmem:[%s0 + $0x60] sm:$0x77]
    %v22 = vld [vmem:[%s0 + $0x68] sm:$0x77]
    %v23 = vld [vmem:[%s0 + $0x70] sm:$0x77]
    %v24 = vld [vmem:[%s0 + $0x78] sm:$0x77]
    %v25 = vld [vmem:[%s0 + $0x80] sm:$0x77]
    %v26 = vld [vmem:[%s0 + $0x88] sm:$0x77]
    %v27 = vld [vmem:[%s0 + $0x90] sm:$0x77]
    %v28 = vld [vmem:[%s0 + $0x98] sm:$0x77]
    %v29 = vld [vmem:[%s0 + $0xa0] sm:$0x77]
    %v30 = vld [vmem:[%s0 + $0xa8] sm:$0x77]
    %v31 = vld [vmem:[%s0 + $0xb0] sm:$0x77]
    %v32 = vld [vmem:[%s0 + $0xb8] sm:$0x77]
    %v33 = vld [vmem:[%s0 + $0xc0] sm:$0x77]
    %v34 = vld [vmem:[%s0 + $0xc8] sm:$0x77]
    %v35 = vld [vmem:[%s0 + $0xd0] sm:$0x77]
    %v36 = vld [vmem:[%s0 + $0xd8] sm:$0x77]
    %v37 = vld [vmem:[%s0 + $0xe0] sm:$0x77]
    %v38 = vld [vmem:[%s0 + $0xe8] sm:$0x77]
    %v39 = vld [vmem:[%s0 + $0xf0] sm:$0x77]
    %v40 = vld [vmem:[%s0 + $0xf8] sm:$0x77]
    %v41 = vunpack.c.l.bf16 %v9
    %v42 = vunpack.c.h.bf16 %v9
    %v43 = vunpack.c.l.bf16 %v10
    %v44 = vunpack.c.h.bf16 %v10
    %v45 = vunpack.c.l.bf16 %v11
    %v46 = vunpack.c.h.bf16 %v11
    %v47 = vunpack.c.l.bf16 %v12
    %v48 = vunpack.c.h.bf16 %v12
    %v49 = vunpack.c.l.bf16 %v13
    %v50 = vunpack.c.h.bf16 %v13
    %v51 = vunpack.c.l.bf16 %v14
    %v52 = vunpack.c.h.bf16 %v14
    %v53 = vunpack.c.l.bf16 %v15
    %v54 = vunpack.c.h.bf16 %v15
    %v55 = vunpack.c.l.bf16 %v16
    %v56 = vunpack.c.h.bf16 %v16
    %v57 = vunpack.c.l.bf16 %v17
    %v58 = vunpack.c.h.bf16 %v17
    %v59 = vunpack.c.l.bf16 %v18
    %v60 = vunpack.c.h.bf16 %v18
    %v61 = vunpack.c.l.bf16 %v19
    %v62 = vunpack.c.h.bf16 %v19
    %v63 = vunpack.c.l.bf16 %v20
    %v64 = vunpack.c.h.bf16 %v20
    %v65 = vunpack.c.l.bf16 %v21
    %v66 = vunpack.c.h.bf16 %v21
    %v67 = vunpack.c.l.bf16 %v22
    %v68 = vunpack.c.h.bf16 %v22
    %v69 = vunpack.c.l.bf16 %v23
    %v70 = vunpack.c.h.bf16 %v23
    %v71 = vunpack.c.l.bf16 %v24
    %v72 = vunpack.c.h.bf16 %v24
    %v73 = vunpack.c.l.bf16 %v25
    %v74 = vunpack.c.h.bf16 %v25
    %v75 = vunpack.c.l.bf16 %v26
    %v76 = vunpack.c.h.bf16 %v26
    %v77 = vunpack.c.l.bf16 %v27
    %v78 = vunpack.c.h.bf16 %v27
    %v79 = vunpack.c.l.bf16 %v28
    %v80 = vunpack.c.h.bf16 %v28
    %v81 = vunpack.c.l.bf16 %v29
    %v82 = vunpack.c.h.bf16 %v29
    %v83 = vunpack.c.l.bf16 %v30
    %v84 = vunpack.c.h.bf16 %v30
    %v85 = vunpack.c.l.bf16 %v31
    %v86 = vunpack.c.h.bf16 %v31
    %v87 = vunpack.c.l.bf16 %v32
    %v88 = vunpack.c.h.bf16 %v32
    %v89 = vunpack.c.l.bf16 %v33
    %v90 = vunpack.c.h.bf16 %v33
    %v91 = vunpack.c.l.bf16 %v34
    %v92 = vunpack.c.h.bf16 %v34
    %v93 = vunpack.c.l.bf16 %v35
    %v94 = vunpack.c.h.bf16 %v35
    %v95 = vunpack.c.l.bf16 %v36
    %v96 = vunpack.c.h.bf16 %v36
    %v97 = vunpack.c.l.bf16 %v37
    %v98 = vunpack.c.h.bf16 %v37
    %v99 = vunpack.c.l.bf16 %v38
    %v100 = vunpack.c.h.bf16 %v38
    %v101 = vunpack.c.l.bf16 %v39
    %v102 = vunpack.c.h.bf16 %v39
    %v103 = vunpack.c.l.bf16 %v40
    %v104 = vunpack.c.h.bf16 %v40
    %vm105 = vcmask 1045504
    %v106 = vsel %vm105, %v41, 0.0
    %v107 = vsel %vm105, %v57, 0.0
    %v108 = vadd.f32 %v106, %v107
    %v109 = vsel %vm105, %v73, 0.0
    %v110 = vadd.f32 %v108, %v109
    %v111 = vsel %vm105, %v89, 0.0
    %v112 = vadd.f32 %v110, %v111
    %v113 = vsel %vm105, %v42, 0.0
    %v114 = vsel %vm105, %v58, 0.0
    %v115 = vadd.f32 %v113, %v114
    %v116 = vsel %vm105, %v74, 0.0
    %v117 = vadd.f32 %v115, %v116
    %v118 = vsel %vm105, %v90, 0.0
    %v119 = vadd.f32 %v117, %v118
    %v120 = vsel %vm105, %v43, 0.0
    %v121 = vsel %vm105, %v59, 0.0
    %v122 = vadd.f32 %v120, %v121
    %v123 = vsel %vm105, %v75, 0.0
    %v124 = vadd.f32 %v122, %v123
    %v125 = vsel %vm105, %v91, 0.0
    %v126 = vadd.f32 %v124, %v125
    %v127 = vsel %vm105, %v44, 0.0
    %v128 = vsel %vm105, %v60, 0.0
    %v129 = vadd.f32 %v127, %v128
    %v130 = vsel %vm105, %v76, 0.0
    %v131 = vadd.f32 %v129, %v130
    %v132 = vsel %vm105, %v92, 0.0
    %v133 = vadd.f32 %v131, %v132
    %v134 = vsel %vm105, %v45, 0.0
    %v135 = vsel %vm105, %v61, 0.0
    %v136 = vadd.f32 %v134, %v135
    %v137 = vsel %vm105, %v77, 0.0
    %v138 = vadd.f32 %v136, %v137
    %v139 = vsel %vm105, %v93, 0.0
    %v140 = vadd.f32 %v138, %v139
    %v141 = vsel %vm105, %v46, 0.0
    %v142 = vsel %vm105, %v62, 0.0
    %v143 = vadd.f32 %v141, %v142
    %v144 = vsel %vm105, %v78, 0.0
    %v145 = vadd.f32 %v143, %v144
    %v146 = vsel %vm105, %v94, 0.0
    %v147 = vadd.f32 %v145, %v146
    %v148 = vsel %vm105, %v47, 0.0
    %v149 = vsel %vm105, %v63, 0.0
    %v150 = vadd.f32 %v148, %v149
    %v151 = vsel %vm105, %v79, 0.0
    %v152 = vadd.f32 %v150, %v151
    %v153 = vsel %vm105, %v95, 0.0
    %v154 = vadd.f32 %v152, %v153
    %v155 = vsel %vm105, %v48, 0.0
    %v156 = vsel %vm105, %v64, 0.0
    %v157 = vadd.f32 %v155, %v156
    %v158 = vsel %vm105, %v80, 0.0
    %v159 = vadd.f32 %v157, %v158
    %v160 = vsel %vm105, %v96, 0.0
    %v161 = vadd.f32 %v159, %v160
    %v162 = vsel %vm105, %v49, 0.0
    %v163 = vsel %vm105, %v65, 0.0
    %v164 = vadd.f32 %v162, %v163
    %v165 = vsel %vm105, %v81, 0.0
    %v166 = vadd.f32 %v164, %v165
    %v167 = vsel %vm105, %v97, 0.0
    %v168 = vadd.f32 %v166, %v167
    %v169 = vsel %vm105, %v50, 0.0
    %v170 = vsel %vm105, %v66, 0.0
    %v171 = vadd.f32 %v169, %v170
    %v172 = vsel %vm105, %v82, 0.0
    %v173 = vadd.f32 %v171, %v172
    %v174 = vsel %vm105, %v98, 0.0
    %v175 = vadd.f32 %v173, %v174
    %v176 = vsel %vm105, %v51, 0.0
    %v177 = vsel %vm105, %v67, 0.0
    %v178 = vadd.f32 %v176, %v177
    %v179 = vsel %vm105, %v83, 0.0
    %v180 = vadd.f32 %v178, %v179
    %v181 = vsel %vm105, %v99, 0.0
    %v182 = vadd.f32 %v180, %v181
    %v183 = vsel %vm105, %v52, 0.0
    %v184 = vsel %vm105, %v68, 0.0
    %v185 = vadd.f32 %v183, %v184
    %v186 = vsel %vm105, %v84, 0.0
    %v187 = vadd.f32 %v185, %v186
    %v188 = vsel %vm105, %v100, 0.0
    %v189 = vadd.f32 %v187, %v188
    %v190 = vsel %vm105, %v53, 0.0
    %v191 = vsel %vm105, %v69, 0.0
    %v192 = vadd.f32 %v190, %v191
    %v193 = vsel %vm105, %v85, 0.0
    %v194 = vadd.f32 %v192, %v193
    %v195 = vsel %vm105, %v101, 0.0
    %v196 = vadd.f32 %v194, %v195
    %v197 = vsel %vm105, %v54, 0.0
    %v198 = vsel %vm105, %v70, 0.0
    %v199 = vadd.f32 %v197, %v198
    %v200 = vsel %vm105, %v86, 0.0
    %v201 = vadd.f32 %v199, %v200
    %v202 = vsel %vm105, %v102, 0.0
    %v203 = vadd.f32 %v201, %v202
    %v204 = vsel %vm105, %v55, 0.0
    %v205 = vsel %vm105, %v71, 0.0
    %v206 = vadd.f32 %v204, %v205
    %v207 = vsel %vm105, %v87, 0.0
    %v208 = vadd.f32 %v206, %v207
    %v209 = vsel %vm105, %v103, 0.0
    %v210 = vadd.f32 %v208, %v209
    %v211 = vsel %vm105, %v56, 0.0
    %v212 = vsel %vm105, %v72, 0.0
    %v213 = vadd.f32 %v211, %v212
    %v214 = vsel %vm105, %v88, 0.0
    %v215 = vadd.f32 %v213, %v214
    %v216 = vsel %vm105, %v104, 0.0
    %v217 = vadd.f32 %v215, %v216
    %v218 = vpack.c.bf16 %v112, %v112
    %v219 = vpack.c.bf16 %v119, %v119
    %v220 = vpack.c.bf16 %v126, %v126
    %v221 = vpack.c.bf16 %v133, %v133
    %v222 = vpack.c.bf16 %v140, %v140
    %v223 = vpack.c.bf16 %v147, %v147
    %v224 = vpack.c.bf16 %v154, %v154
    %v225 = vpack.c.bf16 %v161, %v161
    %v226 = vpack.c.bf16 %v168, %v168
    %v227 = vpack.c.bf16 %v175, %v175
    %v228 = vpack.c.bf16 %v182, %v182
    %v229 = vpack.c.bf16 %v189, %v189
    %v230 = vpack.c.bf16 %v196, %v196
    %v231 = vpack.c.bf16 %v203, %v203
    %v232 = vpack.c.bf16 %v210, %v210
    %v233 = vpack.c.bf16 %v217, %v217
    %v250 = vunpack.c.l.b16 %v218
    %v251 = vunpack.c.l.b16 %v219
    %v252 = vunpack.c.l.b16 %v220
    %v253 = vunpack.c.l.b16 %v221
    %v254 = vunpack.c.l.b16 %v222
    %v255 = vunpack.c.l.b16 %v223
    %v256 = vunpack.c.l.b16 %v224
    %v257 = vunpack.c.l.b16 %v225
    %v258 = vunpack.c.l.b16 %v226
    %v259 = vunpack.c.l.b16 %v227
    %v260 = vunpack.c.l.b16 %v228
    %v261 = vunpack.c.l.b16 %v229
    %v262 = vunpack.c.l.b16 %v230
    %v263 = vunpack.c.l.b16 %v231
    %v264 = vunpack.c.l.b16 %v232
    %v265 = vunpack.c.l.b16 %v233
    %v266 = vpack.c.b16 %v251, %v250
    %v267 = vpack.c.b16 %v253, %v252
    %v268 = vpack.c.b16 %v255, %v254
    %v269 = vpack.c.b16 %v257, %v256
    %v270 = vpack.c.b16 %v259, %v258
    %v271 = vpack.c.b16 %v261, %v260
    %v272 = vpack.c.b16 %v263, %v262
    %v273 = vpack.c.b16 %v265, %v264
    %282 = vst [vmem:[#allocation2] sm:$0x77] %v266
    %283 = vst [vmem:[#allocation2 + $0x8] sm:$0x77] %v267
    %284 = vst [vmem:[#allocation2 + $0x10] sm:$0x77] %v268
    %285 = vst [vmem:[#allocation2 + $0x18] sm:$0x77] %v269
    %286 = vst [vmem:[#allocation2 + $0x20] sm:$0x77] %v270
    %287 = vst [vmem:[#allocation2 + $0x28] sm:$0x77] %v271
    %288 = vst [vmem:[#allocation2 + $0x30] sm:$0x77] %v272
    %289 = vst [vmem:[#allocation2 + $0x38] sm:$0x77] %v273
    // Predicated region
    $region6: #{tpu_custom_call.1} parent=1 // pred_check
      _
    $region7: #{tpu_custom_call.1} parent=1 // pred_check_branch
      %291 = sbr.rel (0) target = $region9
    $region8: #{tpu_custom_call.1} parent=1 // pred_region
      %s293 = ssub.s32 1024, 1024
      %294 = vsyncadd [#allocation3], %s293
      %s296 = sshll.u32 [#allocation2], 4
      %s297 = int_to_ptr.vmem [resolvable:$true] %s296
      %299 = dma.vmem_to_hbm [thread:$0]  %s297, 1024, %s1, [#allocation3]
    $region9: #{tpu_custom_call.1} parent=1 // pred_fallthru
      _
    // Predicated region
    $region10: #{tpu_custom_call.1} parent=1 // pred_check
      _
    $region11: #{tpu_custom_call.1} parent=1 // pred_check_branch
      %301 = sbr.rel (0) target = $region13
    $region12: #{tpu_custom_call.1} parent=1 // pred_region
      %302 = dma.done [#allocation3], 1024
    $region13: #{tpu_custom_call.1} parent=1 // pred_fallthru
      _
    %303 = vsyncpa [#allocation3], 1

</llo_original>
